<compile_context>
chip_gen: v6e
topology: v6e:2x2x1
jax: 0.10.0
libtpu: 0.0.40
codegen_flags: <defaults>
</compile_context>

<pallas_src>
import numpy as np
import jax
import jax.numpy as jnp
from jax.experimental import pallas as pl
from jax.experimental.pallas import tpu as pltpu


def _round_up(x, m):
    return ((x + m - 1) // m) * m


def _make_fft_loss_kernel(tm, w, steps, n_rows, need_mask):
    """Grid = (cores, row-blocks-per-core).  acc_ref carries VPU partial sums."""

    def kernel(p_ref, t_ref, o_ref, acc_ref):
        c = pl.program_id(0)
        s = pl.program_id(1)

        @pl.when(s == 0)
        def _():
            acc_ref[...] = jnp.zeros_like(acc_ref)

        # Diff + square on the VPU; accumulation stays VMEM-resident so the
        # only cross-lane (XLU) reduce + scalar SMEM store happens once/core.
        d = p_ref[...].astype(jnp.float32) - t_ref[...].astype(jnp.float32)
        if need_mask:
            # Rows past the logical end of the array (ragged last block and/or
            # clamped padded per-core blocks) are undefined in the DMA'd tile;
            # mask them to zero before accumulating (mandatory without pad).
            row0 = (c * steps + s) * tm
            rows = jax.lax.broadcasted_iota(jnp.int32, (tm, w), 0) + row0
            d = jnp.where(rows < n_rows, d, 0.0)
        acc_ref[...] += d * d  # pure VPU accumulate; no per-step XLU / scalar RMW

        @pl.when(s == steps - 1)
        def _():
            # One cross-lane reduce per core; per-core partial sum goes to SMEM.
            o_ref[0, 0] = jnp.sum(acc_ref[...])

    return kernel


def fft_loss(predictions, targets, *, row_tile=512, num_cores=2):
    """Pallas TPU implementation of fftLoss.forward."""
    # torch.squeeze intent: drop the channel dim of NCHW predictions (squeeze
    # by axis so a batch of 1 does not collapse).
    if predictions.ndim == targets.ndim + 1:
        pred = jnp.squeeze(predictions, axis=1)
    else:
        pred = predictions
    w = pred.shape[-1]
    m = int(np.prod(pred.shape[:-1]))       # B*H rows, each FFT'd independently

    # Stream the native input dtype (no host-side f32 copies) and do NOT pad:
    # reshape of a contiguous array is free, padding would double HBM traffic.
    p2 = jnp.reshape(pred, (m, w))
    t2 = jnp.reshape(targets, (m, w))
    in_bytes = p2.dtype.itemsize + t2.dtype.itemsize

    # Row tiling: large tiles amortize the ~0.35us/step grid overhead.  Shrink
    # the tile if the VMEM estimate (double-buffered input tiles + accumulator
    # + live temporaries) exceeds a budget that fits every TPU generation.
    def vmem_est(tm_):
        return (2 * tm_ * w * in_bytes      # double-buffered pred/target tiles
                + tm_ * w * 4               # persistent f32 accumulator
                + 3 * tm_ * w * 4)          # d / d*d / mask f32 temporaries

    tm = max(8, _round_up(min(row_tile, _round_up(m, 8)), 8))
    vmem_budget = 40 * 1024 * 1024
    while tm > 8 and vmem_est(tm) > vmem_budget:
        tm = max(8, _round_up(tm // 2, 8))

    nblk = pl.cdiv(m, tm)
    cores = num_cores if nblk >= num_cores else 1
    if cores > 1 and nblk % cores != 0:
        # Prefer shrinking the row tile over padded per-core steps (a padded
        # step is a whole wasted DMA+compute step on the extra core).
        tm_even = max(8, _round_up(-(-m // _round_up(nblk, cores)), 8))
        if pl.cdiv(m, tm_even) % cores == 0:
            tm = tm_even
            nblk = pl.cdiv(m, tm)
    steps = pl.cdiv(nblk, cores)
    total_blocks = cores * steps
    need_clamp = total_blocks > nblk          # fully out-of-range padded blocks
    need_mask = (total_blocks * tm) > m       # ragged last block or padding

    last_blk = nblk - 1
    if need_clamp:
        # Clamp the DMA'd block index to a valid block; the in-kernel mask
        # (driven by the *unclamped* logical row index) zeroes duplicated rows.
        row_map = lambda c, s: (jnp.minimum(c * steps + s, last_blk), 0)
    else:
        row_map = lambda c, s: (c * steps + s, 0)

    kernel = _make_fft_loss_kernel(tm, w, steps, m, need_mask)

    partials = pl.pallas_call(
        kernel,
        out_shape=jax.ShapeDtypeStruct((cores, 1), jnp.float32),
        grid_spec=pltpu.PrefetchScalarGridSpec(
            num_scalar_prefetch=0,
            grid=(cores, steps),
            in_specs=[
                pl.BlockSpec((tm, w), row_map),
                pl.BlockSpec((tm, w), row_map),
            ],
            out_specs=pl.BlockSpec(
                (1, 1), lambda c, s: (c, 0), memory_space=pltpu.MemorySpace.SMEM
            ),
            scratch_shapes=[pltpu.VMEM((tm, w), jnp.float32)],
        ),
        compiler_params=pltpu.CompilerParams(
            dimension_semantics=("parallel", "arbitrary"),
            vmem_limit_bytes=int(
                min(max(vmem_est(tm) + (2 << 20), 32 << 20), 56 << 20)
            ),
        ),
    )(p2, t2)

    # Parseval:  loss = W * mean((p - t)^2) = sum((p - t)^2) / (#rows).
    return jnp.sum(partials) / jnp.float32(m)


if __name__ == "__main__":
    key = jax.random.PRNGKey(0)
    kp, kt = jax.random.split(key)
    B, H, W = 2, 16, 16
    predictions = jax.random.normal(kp, (B, 1, H, W), dtype=jnp.float32)
    targets = jax.random.normal(kt, (B, H, W), dtype=jnp.float32)

    loss = fft_loss(predictions, targets)
    loss = jax.block_until_ready(loss)

    # Pure-JAX reference (intended semantics of the PyTorch module).
    fp = jnp.fft.fft(jnp.squeeze(predictions, axis=1), axis=-1)
    ft = jnp.fft.fft(targets, axis=-1)
    ref = jnp.mean(jnp.abs(fp - ft) ** 2)
    np.testing.assert_allclose(np.asarray(loss), np.asarray(ref), rtol=1e-4, atol=1e-4)

    print("KERNEL_OK")
</pallas_src>

<mosaic_0001>
module attributes {stable_mosaic.version = 11 : i64} {
  func.func @kernel(%arg0: i32, %arg1: i32, %arg2: memref<32x16xf32, #tpu.memory_space<vmem>>, %arg3: memref<32x16xf32, #tpu.memory_space<vmem>>, %arg4: memref<1x1xf32, #tpu.memory_space<smem>>, %arg5: memref<32x16xf32, #tpu.memory_space<vmem>>) attributes {dimension_semantics = [#tpu.dimension_semantics<parallel>, #tpu.dimension_semantics<arbitrary>], iteration_bounds = array<i64: 1, 1>, scalar_prefetch = 0 : i64, scratch_operands = 1 : i64, tpu.core_type = #tpu.core_type<tc>, window_params = [{transform_indices = @transform_0, window_bounds = array<i64: 32, 16>}, {transform_indices = @transform_1, window_bounds = array<i64: 32, 16>}, {transform_indices = @transform_2, window_bounds = array<i64: 1, 1>}]} {
    %c0_i32 = arith.constant 0 : i32
    %0 = arith.cmpi eq, %arg1, %c0_i32 : i32
    %1 = arith.extui %0 : i1 to i32
    %c0_i32_0 = arith.constant 0 : i32
    %2 = arith.cmpi ne, %1, %c0_i32_0 : i32
    scf.if %2 {
      %cst = arith.constant 0.000000e+00 : f32
      %13 = vector.broadcast %cst : f32 to vector<32x16xf32>
      %c0_10 = arith.constant 0 : index
      %c0_11 = arith.constant 0 : index
      %14 = vector.load %arg5[%c0_10, %c0_11] : memref<32x16xf32, #tpu.memory_space<vmem>>, vector<32x16xf32>
      tpu.vector_store %arg5[%c0_10, %c0_11], %13 {strides = array<i32>} : memref<32x16xf32, #tpu.memory_space<vmem>>, vector<32x16xf32>,
    } else {
    }
    %c0 = arith.constant 0 : index
    %c0_1 = arith.constant 0 : index
    %3 = vector.load %arg2[%c0, %c0_1] : memref<32x16xf32, #tpu.memory_space<vmem>>, vector<32x16xf32>
    %c0_2 = arith.constant 0 : index
    %c0_3 = arith.constant 0 : index
    %4 = vector.load %arg3[%c0_2, %c0_3] : memref<32x16xf32, #tpu.memory_space<vmem>>, vector<32x16xf32>
    %5 = arith.subf %3, %4 : vector<32x16xf32>
    %c0_4 = arith.constant 0 : index
    %c0_5 = arith.constant 0 : index
    %6 = vector.load %arg5[%c0_4, %c0_5] : memref<32x16xf32, #tpu.memory_space<vmem>>, vector<32x16xf32>
    %7 = arith.mulf %5, %5 : vector<32x16xf32>
    %8 = arith.addf %6, %7 : vector<32x16xf32>
    %c0_6 = arith.constant 0 : index
    %c0_7 = arith.constant 0 : index
    %9 = vector.load %arg5[%c0_6, %c0_7] : memref<32x16xf32, #tpu.memory_space<vmem>>, vector<32x16xf32>
    tpu.vector_store %arg5[%c0_6, %c0_7], %8 {strides = array<i32>} : memref<32x16xf32, #tpu.memory_space<vmem>>, vector<32x16xf32>,
    %c0_i32_8 = arith.constant 0 : i32
    %10 = arith.cmpi eq, %arg1, %c0_i32_8 : i32
    %11 = arith.extui %10 : i1 to i32
    %c0_i32_9 = arith.constant 0 : i32
    %12 = arith.cmpi ne, %11, %c0_i32_9 : i32
    scf.if %12 {
      %c0_10 = arith.constant 0 : index
      %c0_11 = arith.constant 0 : index
      %13 = vector.load %arg5[%c0_10, %c0_11] : memref<32x16xf32, #tpu.memory_space<vmem>>, vector<32x16xf32>
      %14 = vector.shape_cast %13 : vector<32x16xf32> to vector<1x32x16xf32>
      %cst = arith.constant dense<0.000000e+00> : vector<1xf32>
      %15 = vector.multi_reduction <add>, %14, %cst [1, 2] : vector<1x32x16xf32> to vector<1xf32>
      %16 = vector.shape_cast %15 : vector<1xf32> to vector<1x1x1xf32>
      %17 = vector.extract %16[0, 0, 0] : f32 from vector<1x1x1xf32>
      %c0_12 = arith.constant 0 : index
      %c0_13 = arith.constant 0 : index
      %18 = memref.load %arg4[%c0_12, %c0_13] : memref<1x1xf32, #tpu.memory_space<smem>>
      memref.store %17, %arg4[%c0_12, %c0_13] : memref<1x1xf32, #tpu.memory_space<smem>>
    } else {
    }
    return
  }
  func.func @transform_0(%arg0: i32, %arg1: i32) -> (i32, i32) {
    %c1_i32 = arith.constant 1 : i32
    %0 = arith.muli %arg0, %c1_i32 : i32
    %1 = arith.addi %0, %arg1 : i32
    %c0_i32 = arith.constant 0 : i32
    %c0_i32_0 = arith.constant 0 : i32
    return %1, %c0_i32 : i32, i32
  }
  func.func @transform_1(%arg0: i32, %arg1: i32) -> (i32, i32) {
    %c1_i32 = arith.constant 1 : i32
    %0 = arith.muli %arg0, %c1_i32 : i32
    %1 = arith.addi %0, %arg1 : i32
    %c0_i32 = arith.constant 0 : i32
    %c0_i32_0 = arith.constant 0 : i32
    return %1, %c0_i32 : i32, i32
  }
  func.func @transform_2(%arg0: i32, %arg1: i32) -> (i32, i32) {
    %c0_i32 = arith.constant 0 : i32
    %c0_i32_0 = arith.constant 0 : i32
    return %arg0, %c0_i32 : i32, i32
  }
}

</mosaic_0001>

<llo_original>
// kernel: tpu_custom_call.1
$region0: #{tpu_custom_call.1}
  #allocation0 [shape = 'u32[]', space=smem, size = 0x4, offset = 0x4, fixed_abs, tag = 'smem constant byte address 0x4 - core index']
  #allocation1 [shape = 'u32[144,128]{1,0:T(1,128)}', space=vmem, size = 0x12000, scoped, tag = 'internal scratch']
  #allocation2 [shape = 'f32[32,16]{1,0:T(8,128)}', space=vmem, size = 0x4000, scoped, tag = 'scratch operand']
  %s0 = inlined_call_operand.vmem [shape: f32[32,16], index: 0, kind: input, shape index: {}]
  %s1 = inlined_call_operand.vmem [shape: f32[32,16], index: 1, kind: input, shape index: {}]
  %s2 = inlined_call_operand.hbm [shape: f32[1,1], index: 2, kind: output, shape index: {}]
  %s3 = sld [smem:[#allocation0]]
  $region26: #{tpu_custom_call.1} parent=0
    _
  %s5 = ssub.s32 1, %s3
  %s6 = scalar_select 0, %s5, %s3
  $region1: #{tpu_custom_call.1} parent=0
    #allocation3 [shape = 'u8[512]{0}', space=smem, size = 0x200, scoped, tag = 'output window, operand 0, single buffered']
    #allocation4 [shape = 's32[1]{0}', space=sflag, size = 0x4, scoped, tag = 'scoped memory for tpu_custom_call.1']
    %7 = vsyncpa [#allocation4], 0
    // Predicated region
    $region2: #{tpu_custom_call.1} parent=1 // pred_check
      _
    $region3: #{tpu_custom_call.1} parent=1 // pred_check_branch
      %9 = sbr.rel (0) target = $region5
    $region4: #{tpu_custom_call.1} parent=1 // pred_region
      %s10 = sadd.s32 0, 0
      %s11 = smul.u32 4, %s10
      %p12 = scmp.lt.s32.totalorder %s11, 3
      %s13 = scalar_select %p12, %s11, 3
      %s14 = smul.addr %s13, 8
      %s15 = scalar_lea.vmem %s0, %s14
      %s16 = sadd.s32 0, 0
      %s17 = smul.u32 4, %s16
    $region5: #{tpu_custom_call.1} parent=1 // pred_fallthru
      _
    // Predicated region
    $region6: #{tpu_custom_call.1} parent=1 // pred_check
      _
    $region7: #{tpu_custom_call.1} parent=1 // pred_check_branch
      %19 = sbr.rel (0) target = $region9
    $region8: #{tpu_custom_call.1} parent=1 // pred_region
      %s20 = sadd.s32 0, 0
      %s21 = smul.u32 4, %s20
      %p22 = scmp.lt.s32.totalorder %s21, 3
      %s23 = scalar_select %p22, %s21, 3
      %s24 = smul.addr %s23, 8
      %s25 = scalar_lea.vmem %s1, %s24
      %s26 = sadd.s32 0, 0
      %s27 = smul.u32 4, %s26
    $region9: #{tpu_custom_call.1} parent=1 // pred_fallthru
      _
    %s28 = sadd.s32 0, 0
    %s29 = smul.u32 4, %s28
    %p30 = scmp.lt.s32.totalorder %s29, 3
    %s31 = scalar_select %p30, %s29, 3
    %s32 = smul.addr %s31, 8
    %s33 = scalar_lea.vmem %s0, %s32
    %s34 = sadd.s32 0, 0
    %s35 = smul.u32 4, %s34
    %p36 = scmp.lt.s32.totalorder %s35, 3
    %s37 = scalar_select %p36, %s35, 3
    %s38 = smul.addr %s37, 8
    %s39 = scalar_lea.vmem %s1, %s38
    %s40 = sadd.s32 0, 0
    %s41 = smul.u32 4, %s40
    %p42 = scmp.lt.s32.totalorder %s41, 3
    %s43 = scalar_select %p42, %s41, 3
    %s44 = smul.addr %s43, 8
    %s45 = scalar_lea.vmem %s0, %s44
    %s46 = sadd.s32 0, 0
    %s47 = smul.u32 4, %s46
    %s48 = sadd.s32 0, 0
    %s49 = smul.u32 4, %s48
    %p50 = scmp.lt.s32.totalorder %s49, 3
    %s51 = scalar_select %p50, %s49, 3
    %s52 = smul.addr %s51, 8
    %s53 = scalar_lea.vmem %s1, %s52
    %s54 = sadd.s32 0, 0
    %s55 = smul.u32 4, %s54
    %p56 = scmp.eq.s32.totalorder 0, 0
    // Predicated region
    $region10: #{tpu_custom_call.1} parent=1 // pred_check
      %p57 = pneg %p56
    $region11: #{tpu_custom_call.1} parent=1 // pred_check_branch
      %59 = sbr.rel (%p57) target = $region13
    $region12: #{tpu_custom_call.1} parent=1 // pred_region
      %vm60 = vcmask 130048
      %61 = vst.msk [vmem:[#allocation2] sm:$0xff] %vm60, 0.0
      %62 = vst.msk [vmem:[#allocation2 + $0x8] sm:$0xff] %vm60, 0.0
      %63 = vst.msk [vmem:[#allocation2 + $0x10] sm:$0xff] %vm60, 0.0
      %64 = vst.msk [vmem:[#allocation2 + $0x18] sm:$0xff] %vm60, 0.0
    $region13: #{tpu_custom_call.1} parent=1 // pred_fallthru
      _
    %v65 = vld [vmem:[%s45] sm:$0xff]
    %v66 = vld [vmem:[%s45 + $0x8] sm:$0xff]
    %v67 = vld [vmem:[%s45 + $0x10] sm:$0xff]
    %v68 = vld [vmem:[%s45 + $0x18] sm:$0xff]
    %v69 = vld [vmem:[%s53] sm:$0xff]
    %v70 = vld [vmem:[%s53 + $0x8] sm:$0xff]
    %v71 = vld [vmem:[%s53 + $0x10] sm:$0xff]
    %v72 = vld [vmem:[%s53 + $0x18] sm:$0xff]
    %v73 = vsub.f32 %v65, %v69
    %v74 = vsub.f32 %v66, %v70
    %v75 = vsub.f32 %v67, %v71
    %v76 = vsub.f32 %v68, %v72
    %v77 = vld [vmem:[#allocation2] sm:$0xff]
    %v78 = vld [vmem:[#allocation2 + $0x8] sm:$0xff]
    %v79 = vld [vmem:[#allocation2 + $0x10] sm:$0xff]
    %v80 = vld [vmem:[#allocation2 + $0x18] sm:$0xff]
    %v81 = vmul.f32 %v73, %v73
    %v82 = vmul.f32 %v74, %v74
    %v83 = vmul.f32 %v75, %v75
    %v84 = vmul.f32 %v76, %v76
    %v85 = vadd.f32 %v77, %v81
    %v86 = vadd.f32 %v78, %v82
    %v87 = vadd.f32 %v79, %v83
    %v88 = vadd.f32 %v80, %v84
    %vm89 = vcmask 130048
    %90 = vst.msk [vmem:[#allocation2] sm:$0xff] %vm89, %v85
    %91 = vst.msk [vmem:[#allocation2 + $0x8] sm:$0xff] %vm89, %v86
    %92 = vst.msk [vmem:[#allocation2 + $0x10] sm:$0xff] %vm89, %v87
    %93 = vst.msk [vmem:[#allocation2 + $0x18] sm:$0xff] %vm89, %v88
    // Predicated region
    $region14: #{tpu_custom_call.1} parent=1 // pred_check
      %p94 = pneg %p56
    $region15: #{tpu_custom_call.1} parent=1 // pred_check_branch
      %96 = sbr.rel (%p94) target = $region17
    $region16: #{tpu_custom_call.1} parent=1 // pred_region
      %v97 = vld [vmem:[#allocation2] sm:$0xff]
      %v98 = vld [vmem:[#allocation2 + $0x8] sm:$0xff]
      %v99 = vld [vmem:[#allocation2 + $0x10] sm:$0xff]
      %v100 = vld [vmem:[#allocation2 + $0x18] sm:$0xff]
      %v101 = vsel %vm89, %v97, 0.0
      %v102 = vsel %vm89, %v98, 0.0
      %v103 = vadd.f32 %v101, %v102
      %v104 = vsel %vm89, %v99, 0.0
      %v105 = vadd.f32 %v103, %v104
      %v106 = vsel %vm89, %v100, 0.0
      %v107 = vadd.f32 %v105, %v106
      %108 = vadd.xlane.f32.xlu0 %v107
      %v109 = vpop.xlane.xlu0 %108
      %v110 = vrot.slane %v109, 4
      %v111 = vadd.f32 %v109, %v110
      %v112 = vrot.slane %v111, 2
      %v113 = vadd.f32 %v111, %v112
      %v114 = vrot.slane %v113, 1
      %v115 = vadd.f32 %v113, %v114
      %s116 = vtos %v115
      %s117 = scalar_lea.smem [#allocation3], 0
      %118 = sst [smem:[%s117]] %s116
    $region17: #{tpu_custom_call.1} parent=1 // pred_fallthru
      _
    // Predicated region
    $region18: #{tpu_custom_call.1} parent=1 // pred_check
      _
    $region19: #{tpu_custom_call.1} parent=1 // pred_check_branch
      %120 = sbr.rel (0) target = $region21
    $region20: #{tpu_custom_call.1} parent=1 // pred_region
      %s122 = ssub.s32 16, 16
      %123 = vsyncadd [#allocation4], %s122
      %126 = dma.smem_to_hbm [#allocation3], 16, %s2, [#allocation4]
    $region21: #{tpu_custom_call.1} parent=1 // pred_fallthru
      _
    // Predicated region
    $region22: #{tpu_custom_call.1} parent=1 // pred_check
      _
    $region23: #{tpu_custom_call.1} parent=1 // pred_check_branch
      %128 = sbr.rel (0) target = $region25
    $region24: #{tpu_custom_call.1} parent=1 // pred_region
      %129 = dma.done [#allocation4], 16
    $region25: #{tpu_custom_call.1} parent=1 // pred_fallthru
      _
    %130 = sfence
    %131 = vsyncpa [#allocation4], 1

</llo_original>
